<compile_context>
chip_gen: v7x
topology: tpu7x:2x2x1
jax: 0.10.0
libtpu: 0.0.40
codegen_flags: <defaults>
</compile_context>

<pallas_src>
import math

import jax
import jax.numpy as jnp
from jax.experimental import pallas as pl
from jax.experimental.pallas import tpu as pltpu


def _linear_argmax_kernel(x_ref, wb_ref, o_ref):
    """Fused linear (x @ W.T + b) + global flattened argmax.

    x_ref : (B, F)     f32  VMEM
    wb_ref: (F + 1, F) f32  VMEM   rows 0..F-1 = W.T, row F = bias
    o_ref : (1,)       i32  SMEM   flattened argmax index (row-major, torch-style)
    """
    B, F = x_ref.shape
    x = x_ref[...]          # (B, F)    f32
    wb = wb_ref[...]        # (F+1, F)  f32

    # ---- Linear layer on the VPU: out = bias + sum_k x[:, k] * W.T[k, :] ----
    # Statically unrolled K-step broadcast-FMA; exact f32 (no MXU, no bf16 passes).
    acc = wb[F:F + 1, :] + x[:, 0:1] * wb[0:1, :]        # (B, F)
    for k in range(1, F):
        acc = acc + x[:, k:k + 1] * wb[k:k + 1, :]

    # ---- Fused global argmax (first-occurrence tie-break, torch semantics) ----
    BIG = jnp.int32(jnp.iinfo(jnp.int32).max)
    cols = jax.lax.broadcasted_iota(jnp.int32, (B, F), 1)
    rows = jax.lax.broadcasted_iota(jnp.int32, (B, 1), 0)

    # Stage 1: per-row max + first column achieving it (lane reductions).
    row_max = jnp.max(acc, axis=1, keepdims=True)                         # (B, 1)
    row_col = jnp.min(jnp.where(acc == row_max, cols, BIG),
                      axis=1, keepdims=True)                              # (B, 1)

    # Stage 2: cross-row (sublane) reduction over the B candidates.
    g_max = jnp.max(row_max)                                              # scalar
    row_flat = rows * jnp.int32(F) + row_col                              # (B, 1)
    cand = jnp.where(row_max == g_max, row_flat, BIG)
    o_ref[0] = jnp.min(cand).astype(jnp.int32)


def _build_linear_argmax_call(B, F):
    """Builds (and jits) the pallas_call for fixed (B, F)."""
    call = pl.pallas_call(
        _linear_argmax_kernel,
        out_shape=jax.ShapeDtypeStruct((1,), jnp.int32),
        in_specs=[
            pl.BlockSpec(memory_space=pltpu.VMEM),   # x              (full array)
            pl.BlockSpec(memory_space=pltpu.VMEM),   # [W.T; b] pack  (full array)
        ],
        out_specs=pl.BlockSpec(memory_space=pltpu.SMEM),
        compiler_params=pltpu.CompilerParams(vmem_limit_bytes=4 * 1024 * 1024),
        cost_estimate=pl.CostEstimate(
            flops=2 * B * F * F,
            transcendentals=0,
            bytes_accessed=(B * F + (F + 1) * F) * 4 + 4,
        ),
    )
    return jax.jit(call)


def pack_params(w, b):
    """w: (F, F) PyTorch layout (out_features x in_features), b: (F,).
    Returns the (F+1, F) f32 packed [W.T; b] array (done once, off the hot path)."""
    F = w.shape[0]
    return jnp.concatenate(
        [w.T.astype(jnp.float32), b.reshape(1, F).astype(jnp.float32)], axis=0)


class PallasModel:
    """Mirrors the PyTorch Model: 4 Linear(9,9) layers selected by one-shot flags,
    each forward returns the flattened argmax of the selected layer's output."""

    F = 9

    def __init__(self, key):
        self.flag1 = self.flag2 = self.flag3 = self.flag4 = True
        bound = 1.0 / math.sqrt(self.F)
        keys = jax.random.split(key, 8)
        self._wb = []  # packed [W.T; b] per layer, built once
        for i in range(4):
            w = jax.random.uniform(keys[2 * i], (self.F, self.F), jnp.float32,
                                   -bound, bound)
            b = jax.random.uniform(keys[2 * i + 1], (self.F,), jnp.float32,
                                   -bound, bound)
            self._wb.append(pack_params(w, b))
        self._call = None  # built lazily for the observed batch size

    def forward(self, x):
        if self.flag1:
            self.flag1 = False
            wb = self._wb[0]
        elif self.flag2:
            self.flag2 = False
            wb = self._wb[1]
        elif self.flag3:
            self.flag3 = False
            wb = self._wb[2]
        elif self.flag4:
            self.flag4 = False
            wb = self._wb[3]
        else:
            raise RuntimeError('Все флаги отключены. Сбросьте модель.')
        x = x.astype(jnp.float32)
        if self._call is None:
            self._call = _build_linear_argmax_call(x.shape[0], self.F)
        return self._call(x, wb)  # (1,) int32

    def reset(self):
        self.flag1 = self.flag2 = self.flag3 = self.flag4 = True


if __name__ == "__main__":
    key = jax.random.PRNGKey(0)
    k_model, k_x = jax.random.split(key)

    B, F = 8, 9  # batch=8, features=9 (Linear(9, 9))
    model = PallasModel(k_model)
    x = jax.random.normal(k_x, (B, F), jnp.float32)

    idx = model.forward(x)          # first call -> step1 path
    jax.block_until_ready(idx)

    # Reference in plain JAX: exact-f32 linear + flattened argmax (step1 params).
    wb1 = model._wb[0]
    ref_out = jnp.dot(x, wb1[:F, :], precision=jax.lax.Precision.HIGHEST) + wb1[F, :]
    ref = jnp.argmax(ref_out.reshape(-1)).astype(jnp.int32)
    assert int(idx[0]) == int(ref), f"mismatch: kernel={int(idx[0])} ref={int(ref)}"

    print("KERNEL_OK")
</pallas_src>

<mosaic_0001>
module attributes {stable_mosaic.version = 11 : i64} {
  func.func @_linear_argmax_kernel(%arg0: memref<8x9xf32, #tpu.memory_space<vmem>>, %arg1: memref<10x9xf32, #tpu.memory_space<vmem>>, %arg2: memref<1xi32, #tpu.memory_space<smem>>) attributes {dimension_semantics = [], scalar_prefetch = 0 : i64, scratch_operands = 0 : i64, tpu.core_type = #tpu.core_type<tc>} {
    %c0 = arith.constant 0 : index
    %c0_0 = arith.constant 0 : index
    %0 = vector.load %arg0[%c0, %c0_0] : memref<8x9xf32, #tpu.memory_space<vmem>>, vector<8x9xf32>
    %c0_1 = arith.constant 0 : index
    %c0_2 = arith.constant 0 : index
    %1 = vector.load %arg1[%c0_1, %c0_2] : memref<10x9xf32, #tpu.memory_space<vmem>>, vector<10x9xf32>
    %2 = vector.extract_strided_slice %1 {offsets = [9, 0], sizes = [1, 9], strides = [1, 1]} : vector<10x9xf32> to vector<1x9xf32>
    %3 = vector.extract_strided_slice %0 {offsets = [0, 0], sizes = [8, 1], strides = [1, 1]} : vector<8x9xf32> to vector<8x1xf32>
    %4 = vector.extract_strided_slice %1 {offsets = [0, 0], sizes = [1, 9], strides = [1, 1]} : vector<10x9xf32> to vector<1x9xf32>
    %5 = vector.broadcast %3 : vector<8x1xf32> to vector<8x9xf32>
    %6 = vector.broadcast %4 : vector<1x9xf32> to vector<8x9xf32>
    %7 = arith.mulf %5, %6 : vector<8x9xf32>
    %8 = vector.broadcast %2 : vector<1x9xf32> to vector<8x9xf32>
    %9 = arith.addf %8, %7 : vector<8x9xf32>
    %10 = vector.extract_strided_slice %0 {offsets = [0, 1], sizes = [8, 1], strides = [1, 1]} : vector<8x9xf32> to vector<8x1xf32>
    %11 = vector.extract_strided_slice %1 {offsets = [1, 0], sizes = [1, 9], strides = [1, 1]} : vector<10x9xf32> to vector<1x9xf32>
    %12 = vector.broadcast %10 : vector<8x1xf32> to vector<8x9xf32>
    %13 = vector.broadcast %11 : vector<1x9xf32> to vector<8x9xf32>
    %14 = arith.mulf %12, %13 : vector<8x9xf32>
    %15 = arith.addf %9, %14 : vector<8x9xf32>
    %16 = vector.extract_strided_slice %0 {offsets = [0, 2], sizes = [8, 1], strides = [1, 1]} : vector<8x9xf32> to vector<8x1xf32>
    %17 = vector.extract_strided_slice %1 {offsets = [2, 0], sizes = [1, 9], strides = [1, 1]} : vector<10x9xf32> to vector<1x9xf32>
    %18 = vector.broadcast %16 : vector<8x1xf32> to vector<8x9xf32>
    %19 = vector.broadcast %17 : vector<1x9xf32> to vector<8x9xf32>
    %20 = arith.mulf %18, %19 : vector<8x9xf32>
    %21 = arith.addf %15, %20 : vector<8x9xf32>
    %22 = vector.extract_strided_slice %0 {offsets = [0, 3], sizes = [8, 1], strides = [1, 1]} : vector<8x9xf32> to vector<8x1xf32>
    %23 = vector.extract_strided_slice %1 {offsets = [3, 0], sizes = [1, 9], strides = [1, 1]} : vector<10x9xf32> to vector<1x9xf32>
    %24 = vector.broadcast %22 : vector<8x1xf32> to vector<8x9xf32>
    %25 = vector.broadcast %23 : vector<1x9xf32> to vector<8x9xf32>
    %26 = arith.mulf %24, %25 : vector<8x9xf32>
    %27 = arith.addf %21, %26 : vector<8x9xf32>
    %28 = vector.extract_strided_slice %0 {offsets = [0, 4], sizes = [8, 1], strides = [1, 1]} : vector<8x9xf32> to vector<8x1xf32>
    %29 = vector.extract_strided_slice %1 {offsets = [4, 0], sizes = [1, 9], strides = [1, 1]} : vector<10x9xf32> to vector<1x9xf32>
    %30 = vector.broadcast %28 : vector<8x1xf32> to vector<8x9xf32>
    %31 = vector.broadcast %29 : vector<1x9xf32> to vector<8x9xf32>
    %32 = arith.mulf %30, %31 : vector<8x9xf32>
    %33 = arith.addf %27, %32 : vector<8x9xf32>
    %34 = vector.extract_strided_slice %0 {offsets = [0, 5], sizes = [8, 1], strides = [1, 1]} : vector<8x9xf32> to vector<8x1xf32>
    %35 = vector.extract_strided_slice %1 {offsets = [5, 0], sizes = [1, 9], strides = [1, 1]} : vector<10x9xf32> to vector<1x9xf32>
    %36 = vector.broadcast %34 : vector<8x1xf32> to vector<8x9xf32>
    %37 = vector.broadcast %35 : vector<1x9xf32> to vector<8x9xf32>
    %38 = arith.mulf %36, %37 : vector<8x9xf32>
    %39 = arith.addf %33, %38 : vector<8x9xf32>
    %40 = vector.extract_strided_slice %0 {offsets = [0, 6], sizes = [8, 1], strides = [1, 1]} : vector<8x9xf32> to vector<8x1xf32>
    %41 = vector.extract_strided_slice %1 {offsets = [6, 0], sizes = [1, 9], strides = [1, 1]} : vector<10x9xf32> to vector<1x9xf32>
    %42 = vector.broadcast %40 : vector<8x1xf32> to vector<8x9xf32>
    %43 = vector.broadcast %41 : vector<1x9xf32> to vector<8x9xf32>
    %44 = arith.mulf %42, %43 : vector<8x9xf32>
    %45 = arith.addf %39, %44 : vector<8x9xf32>
    %46 = vector.extract_strided_slice %0 {offsets = [0, 7], sizes = [8, 1], strides = [1, 1]} : vector<8x9xf32> to vector<8x1xf32>
    %47 = vector.extract_strided_slice %1 {offsets = [7, 0], sizes = [1, 9], strides = [1, 1]} : vector<10x9xf32> to vector<1x9xf32>
    %48 = vector.broadcast %46 : vector<8x1xf32> to vector<8x9xf32>
    %49 = vector.broadcast %47 : vector<1x9xf32> to vector<8x9xf32>
    %50 = arith.mulf %48, %49 : vector<8x9xf32>
    %51 = arith.addf %45, %50 : vector<8x9xf32>
    %52 = vector.extract_strided_slice %0 {offsets = [0, 8], sizes = [8, 1], strides = [1, 1]} : vector<8x9xf32> to vector<8x1xf32>
    %53 = vector.extract_strided_slice %1 {offsets = [8, 0], sizes = [1, 9], strides = [1, 1]} : vector<10x9xf32> to vector<1x9xf32>
    %54 = vector.broadcast %52 : vector<8x1xf32> to vector<8x9xf32>
    %55 = vector.broadcast %53 : vector<1x9xf32> to vector<8x9xf32>
    %56 = arith.mulf %54, %55 : vector<8x9xf32>
    %57 = arith.addf %51, %56 : vector<8x9xf32>
    %58 = tpu.iota {dimensions = array<i32: 1>} : vector<8x9xi32>
    %59 = tpu.iota {dimensions = array<i32: 0>} : vector<8x1xi32>
    %cst = arith.constant dense<0xFF800000> : vector<8xf32>
    %60 = vector.multi_reduction <maximumf>, %57, %cst [1] : vector<8x9xf32> to vector<8xf32>
    %61 = vector.shape_cast %60 : vector<8xf32> to vector<8x1xf32>
    %62 = vector.broadcast %61 : vector<8x1xf32> to vector<8x9xf32>
    %63 = arith.cmpf oeq, %57, %62 : vector<8x9xf32>
    %c2147483647_i32 = arith.constant 2147483647 : i32
    %64 = vector.broadcast %c2147483647_i32 : i32 to vector<8x9xi32>
    %65 = arith.select %63, %58, %64 : vector<8x9xi1>, vector<8x9xi32>
    %cst_3 = arith.constant dense<2147483647> : vector<8xi32>
    %66 = vector.multi_reduction <minsi>, %65, %cst_3 [1] : vector<8x9xi32> to vector<8xi32>
    %67 = vector.shape_cast %66 : vector<8xi32> to vector<8x1xi32>
    %68 = vector.shape_cast %61 : vector<8x1xf32> to vector<1x8x1xf32>
    %cst_4 = arith.constant dense<0xFF800000> : vector<1xf32>
    %69 = vector.multi_reduction <maximumf>, %68, %cst_4 [1, 2] : vector<1x8x1xf32> to vector<1xf32>
    %70 = vector.shape_cast %69 : vector<1xf32> to vector<1x1x1xf32>
    %71 = vector.extract %70[0, 0, 0] : f32 from vector<1x1x1xf32>
    %c9_i32 = arith.constant 9 : i32
    %72 = vector.broadcast %c9_i32 : i32 to vector<8x1xi32>
    %73 = arith.muli %59, %72 : vector<8x1xi32>
    %74 = arith.addi %73, %67 : vector<8x1xi32>
    %75 = vector.broadcast %71 : f32 to vector<8x1xf32>
    %76 = arith.cmpf oeq, %61, %75 : vector<8x1xf32>
    %c2147483647_i32_5 = arith.constant 2147483647 : i32
    %77 = vector.broadcast %c2147483647_i32_5 : i32 to vector<8x1xi32>
    %78 = arith.select %76, %74, %77 : vector<8x1xi1>, vector<8x1xi32>
    %79 = vector.shape_cast %78 : vector<8x1xi32> to vector<1x8x1xi32>
    %cst_6 = arith.constant dense<2147483647> : vector<1xi32>
    %80 = vector.multi_reduction <minsi>, %79, %cst_6 [1, 2] : vector<1x8x1xi32> to vector<1xi32>
    %81 = vector.shape_cast %80 : vector<1xi32> to vector<1x1x1xi32>
    %82 = vector.extract %81[0, 0, 0] : i32 from vector<1x1x1xi32>
    %c0_7 = arith.constant 0 : index
    %83 = memref.load %arg2[%c0_7] : memref<1xi32, #tpu.memory_space<smem>>
    memref.store %82, %arg2[%c0_7] : memref<1xi32, #tpu.memory_space<smem>>
    return
  }
}

</mosaic_0001>

<llo_original>
// kernel: tpu_custom_call.1
$region0: #{tpu_custom_call.1}
  #allocation0 [shape = 'u32[]', space=smem, size = 0x4, offset = 0x4, fixed_abs, tag = 'smem constant byte address 0x4 - core index']
  #allocation1 [shape = 'u32[144,128]{1,0:T(1,128)}', space=vmem, size = 0x12000, scoped, tag = 'internal scratch']
  %s0 = inlined_call_operand.hbm [shape: f32[8,9], index: 0, kind: input, shape index: {}]
  %s1 = inlined_call_operand.hbm [shape: f32[10,9], index: 1, kind: input, shape index: {}]
  %s2 = inlined_call_operand.hbm [shape: s32[1], index: 2, kind: output, shape index: {}]
  %s3 = sld [smem:[#allocation0]]
  $region26: #{tpu_custom_call.1} parent=0
    _
  %s5 = ssub.s32 1, %s3
  %s6 = scalar_select 0, %s5, %s3
  $region1: #{tpu_custom_call.1} parent=0
    #allocation2 [shape = 'u8[4096]{0}', space=vmem, size = 0x1000, scoped, tag = 'input window, operand 0, single buffered']
    #allocation3 [shape = 's32[1]{0}', space=sflag, size = 0x4, scoped, tag = 'scoped memory for tpu_custom_call.1']
    #allocation4 [shape = 's32[1]{0}', space=sflag, size = 0x4, scoped, tag = 'scoped memory for tpu_custom_call.1']
    #allocation5 [shape = 'u8[8192]{0}', space=vmem, size = 0x2000, scoped, tag = 'input window, operand 1, single buffered']
    #allocation6 [shape = 's32[1]{0}', space=sflag, size = 0x4, scoped, tag = 'scoped memory for tpu_custom_call.1']
    #allocation7 [shape = 'u8[512]{0}', space=smem, size = 0x200, scoped, tag = 'output window, operand 0, single buffered']
    %7 = vsyncpa [#allocation3], 0
    %8 = vsyncpa [#allocation6], 0
    %9 = vsyncpa [#allocation4], 0
    // Predicated region
    $region2: #{tpu_custom_call.1} parent=1 // pred_check
      _
    $region3: #{tpu_custom_call.1} parent=1 // pred_check_branch
      %11 = sbr.rel (0) target = $region5
    $region4: #{tpu_custom_call.1} parent=1 // pred_region
      %s13 = ssub.s32 128, 128
      %14 = vsyncadd [#allocation3], %s13
      %s16 = sshll.u32 [#allocation2], 4
      %s17 = int_to_ptr.vmem [resolvable:$true] %s16
      %19 = dma.hbm_to_vmem [thread:$0]  %s0, 128, %s17, [#allocation3]
    $region5: #{tpu_custom_call.1} parent=1 // pred_fallthru
      _
    // Predicated region
    $region6: #{tpu_custom_call.1} parent=1 // pred_check
      _
    $region7: #{tpu_custom_call.1} parent=1 // pred_check_branch
      %21 = sbr.rel (0) target = $region9
    $region8: #{tpu_custom_call.1} parent=1 // pred_region
      %s23 = ssub.s32 256, 256
      %24 = vsyncadd [#allocation6], %s23
      %s25 = sshll.u32 [#allocation5], 4
      %s26 = int_to_ptr.vmem [resolvable:$true] %s25
      %31 = dma.hbm_to_vmem [thread:$0]  %s1, 256, %s26, [#allocation6], 128, 128, 8
    $region9: #{tpu_custom_call.1} parent=1 // pred_fallthru
      _
    // Predicated region
    $region10: #{tpu_custom_call.1} parent=1 // pred_check
      _
    $region11: #{tpu_custom_call.1} parent=1 // pred_check_branch
      %33 = sbr.rel (0) target = $region13
    $region12: #{tpu_custom_call.1} parent=1 // pred_region
      %34 = dma.done [#allocation3], 128
    $region13: #{tpu_custom_call.1} parent=1 // pred_fallthru
      _
    // Predicated region
    $region14: #{tpu_custom_call.1} parent=1 // pred_check
      _
    $region15: #{tpu_custom_call.1} parent=1 // pred_check_branch
      %36 = sbr.rel (0) target = $region17
    $region16: #{tpu_custom_call.1} parent=1 // pred_region
      %37 = dma.done [#allocation6], 256
    $region17: #{tpu_custom_call.1} parent=1 // pred_fallthru
      _
    %v38 = vld [vmem:[#allocation2] sm:$0xff]
    %v39 = vld [vmem:[#allocation5] sm:$0xff]
    %v40 = vld [vmem:[#allocation5 + $0x8] sm:$0x3]
    %42 = vset.pattern.permute.xlu0 0
    %43 = vperm.xlu0 %42, %v38
    %v44 = vpop.permute.xlu0 %43
    %v46 = vlaneseq
    %v47 = vshrl.u32 %v46, 7
    %v48 = vsub.s32 0, %v47
    %v49 = vrot.slane %v39, %v48
    %v50 = vmul.f32 %v44, %v49
    %v51 = vlaneseq
    %v52 = vshrl.u32 %v51, 7
    %v53 = vsub.s32 1, %v52
    %v54 = vrot.slane %v40, %v53
    %v55 = vadd.f32 %v54, %v50
    %56 = vset.pattern.permute.xlu0 1
    %57 = vperm.xlu0 %56, %v38
    %v58 = vpop.permute.xlu0 %57
    %v60 = vlaneseq
    %v61 = vshrl.u32 %v60, 7
    %v62 = vsub.s32 1, %v61
    %v63 = vrot.slane %v39, %v62
    %v64 = vmul.f32 %v58, %v63
    %v65 = vadd.f32 %v55, %v64
    %66 = vset.pattern.permute.xlu0 2
    %67 = vperm.xlu0 %66, %v38
    %v68 = vpop.permute.xlu0 %67
    %v70 = vlaneseq
    %v71 = vshrl.u32 %v70, 7
    %v72 = vsub.s32 2, %v71
    %v73 = vrot.slane %v39, %v72
    %v74 = vmul.f32 %v68, %v73
    %v75 = vadd.f32 %v65, %v74
    %76 = vset.pattern.permute.xlu0 3
    %77 = vperm.xlu0 %76, %v38
    %v78 = vpop.permute.xlu0 %77
    %v80 = vlaneseq
    %v81 = vshrl.u32 %v80, 7
    %v82 = vsub.s32 3, %v81
    %v83 = vrot.slane %v39, %v82
    %v84 = vmul.f32 %v78, %v83
    %v85 = vadd.f32 %v75, %v84
    %86 = vset.pattern.permute.xlu0 4
    %87 = vperm.xlu0 %86, %v38
    %v88 = vpop.permute.xlu0 %87
    %v90 = vlaneseq
    %v91 = vshrl.u32 %v90, 7
    %v92 = vsub.s32 4, %v91
    %v93 = vrot.slane %v39, %v92
    %v94 = vmul.f32 %v88, %v93
    %v95 = vadd.f32 %v85, %v94
    %96 = vset.pattern.permute.xlu0 5
    %97 = vperm.xlu0 %96, %v38
    %v98 = vpop.permute.xlu0 %97
    %v100 = vlaneseq
    %v101 = vshrl.u32 %v100, 7
    %v102 = vsub.s32 5, %v101
    %v103 = vrot.slane %v39, %v102
    %v104 = vmul.f32 %v98, %v103
    %v105 = vadd.f32 %v95, %v104
    %106 = vset.pattern.permute.xlu0 6
    %107 = vperm.xlu0 %106, %v38
    %v108 = vpop.permute.xlu0 %107
    %v110 = vlaneseq
    %v111 = vshrl.u32 %v110, 7
    %v112 = vsub.s32 6, %v111
    %v113 = vrot.slane %v39, %v112
    %v114 = vmul.f32 %v108, %v113
    %v115 = vadd.f32 %v105, %v114
    %116 = vset.pattern.permute.xlu0 7
    %117 = vperm.xlu0 %116, %v38
    %v118 = vpop.permute.xlu0 %117
    %v120 = vlaneseq
    %v121 = vshrl.u32 %v120, 7
    %v122 = vsub.s32 7, %v121
    %v123 = vrot.slane %v39, %v122
    %v124 = vmul.f32 %v118, %v123
    %v125 = vadd.f32 %v115, %v124
    %126 = vset.pattern.permute.xlu0 8
    %127 = vperm.xlu0 %126, %v38
    %v128 = vpop.permute.xlu0 %127
    %v130 = vlaneseq
    %v131 = vshrl.u32 %v130, 7
    %v132 = vsub.s32 0, %v131
    %v133 = vrot.slane %v40, %v132
    %v134 = vmul.f32 %v128, %v133
    %v135 = vadd.f32 %v125, %v134
    %v136 = vlaneseq
    %v137 = vand.u32 %v136, 127
    %v138 = vlaneseq
    %v139 = vshrl.u32 %v138, 7
    %vm140 = vcmask 72704
    %v141 = vsel %vm140, %v135, -inf
    %142 = vmax.xlane.f32.xlu0 %v141
    %v143 = vpop.xlane.xlu0 %142
    %vm144 = vcmp.eq.f32.partialorder %v135, %v143
    %v145 = vsel %vm144, %v137, 2147483647
    %v146 = vsel %vm140, %v145, 2147483647
    %v147 = vand.u32 %v146, 65535
    %v148 = vshra.s32 %v146, 16
    %v149 = vcvt.s32.f32 %v147
    %v150 = vcvt.s32.f32 %v148
    %151 = vmin.xlane.f32.xlu0 %v150
    %v152 = vpop.xlane.xlu0 %151
    %vm153 = vcmp.eq.f32.partialorder %v150, %v152
    %v154 = vsel %vm153, %v149, inf
    %155 = vmin.xlane.f32.xlu0 %v154
    %v156 = vpop.xlane.xlu0 %155
    %v157 = vcvt.f32.s32 %v156
    %v158 = vcvt.f32.s32 %v152
    %v159 = vshll.u32 %v158, 16
    %v160 = vadd.s32 %v159, %v157
    %v161 = vrot.slane %v143, 4
    %v162 = vmax.f32 %v143, %v161
    %v163 = vrot.slane %v162, 2
    %v164 = vmax.f32 %v162, %v163
    %v165 = vrot.slane %v164, 1
    %v166 = vmax.f32 %v164, %v165
    %s167 = vtos %v166
    %v168 = vmul.u32 %v139, 9
    %v169 = vadd.s32 %v168, %v160
    %v170 = vstv %s167
    %vm171 = vcmp.eq.f32.partialorder %v143, %v170
    %v172 = vsel %vm171, %v169, 2147483647
    %v173 = vrot.slane %v172, 4
    %vm174 = vcmp.lt.s32.totalorder %v172, %v173
    %v175 = vsel %vm174, %v172, %v173
    %v176 = vrot.slane %v175, 2
    %vm177 = vcmp.lt.s32.totalorder %v175, %v176
    %v178 = vsel %vm177, %v175, %v176
    %v179 = vrot.slane %v178, 1
    %vm180 = vcmp.lt.s32.totalorder %v178, %v179
    %v181 = vsel %vm180, %v178, %v179
    %s182 = vtos %v181
    %s183 = scalar_lea.smem [#allocation7], 0
    %184 = sst [smem:[%s183]] %s182
    // Predicated region
    $region18: #{tpu_custom_call.1} parent=1 // pred_check
      _
    $region19: #{tpu_custom_call.1} parent=1 // pred_check_branch
      %186 = sbr.rel (0) target = $region21
    $region20: #{tpu_custom_call.1} parent=1 // pred_region
      %s188 = ssub.s32 16, 16
      %189 = vsyncadd [#allocation4], %s188
      %192 = dma.smem_to_hbm [#allocation7], 16, %s2, [#allocation4]
    $region21: #{tpu_custom_call.1} parent=1 // pred_fallthru
      _
    // Predicated region
    $region22: #{tpu_custom_call.1} parent=1 // pred_check
      _
    $region23: #{tpu_custom_call.1} parent=1 // pred_check_branch
      %194 = sbr.rel (0) target = $region25
    $region24: #{tpu_custom_call.1} parent=1 // pred_region
      %195 = dma.done [#allocation4], 16
    $region25: #{tpu_custom_call.1} parent=1 // pred_fallthru
      _
    %196 = sfence
    %197 = vsyncpa [#allocation3], 1
    %198 = vsyncpa [#allocation6], 1
    %199 = vsyncpa [#allocation4], 1

</llo_original>
